<compile_context>
chip_gen: v7x
topology: tpu7x:2x2x1
jax: 0.10.0
libtpu: 0.0.40
codegen_flags: <defaults>
</compile_context>

<pallas_src>
import functools

import jax
import jax.numpy as jnp
from jax import lax
from jax.experimental import pallas as pl
from jax.experimental.pallas import tpu as pltpu


def residual_kernel(x_ref, mask_ref, w3_ref, w1_ref, o_ref, *, W, matmul_dtype):
    # x_ref   : (Nb, Cin, HW)   f32 activations (channels on sublanes, HW on lanes)
    # mask_ref: (9, HW)         f32 0/1 boundary masks, one row per 3x3 tap
    # w3_ref  : (Crh, 9*Cin)    matmul_dtype, im2col-packed 3x3 weights
    # w1_ref  : (Cout, Crh)     matmul_dtype, 1x1 weights
    # o_ref   : (Nb, Cout, HW)  f32
    Nb, Cin, HW = x_ref.shape

    xs = []      # pre-ReLU activations per image (for the residual add)
    slabs = []   # per-image (9*Cin, HW) im2col slabs
    for n in range(Nb):
        x = x_ref[n]                              # (Cin, HW)
        xs.append(x)
        xr = jnp.maximum(x, 0.0)                  # ReLU(x)
        taps = []
        for k in range(9):
            dy, dx = k // 3 - 1, k % 3 - 1
            d = dy * W + dx
            if d == 0:
                taps.append(xr)
            else:
                # Circular lane roll within this image; out-of-image (and any
                # wrapped) lanes are zeroed by the precomputed mask row.
                shifted = pltpu.roll(xr, (-d) % HW, axis=1)
                taps.append(shifted * mask_ref[pl.ds(k, 1), :])
        slabs.append(jnp.concatenate(taps, axis=0).astype(matmul_dtype))

    # One wide im2col RHS across the whole image block: (9*Cin, Nb*HW).
    patches = jnp.concatenate(slabs, axis=1)

    # 3x3 conv as a single MXU matmul (K = 9*Cin), f32 accumulation, then ReLU.
    h = jnp.maximum(
        jnp.dot(w3_ref[...], patches, preferred_element_type=jnp.float32), 0.0)
    # 1x1 conv.
    out = jnp.dot(w1_ref[...], h.astype(matmul_dtype),
                  preferred_element_type=jnp.float32)      # (Cout, Nb*HW)

    # Residual add with the pre-ReLU input; lane-dense, lane-aligned slices.
    for n in range(Nb):
        o_ref[n] = (xs[n] + out[:, n * HW:(n + 1) * HW]).astype(o_ref.dtype)


def _pick_block_n(N):
    """Largest divisor Nb of N keeping >= 2 grid steps (2 TCs on v7x)."""
    if N <= 1:
        return max(N, 1)
    for nb in range(N // 2, 0, -1):
        if N % nb == 0:
            return nb
    return 1


def _boundary_masks(H, W):
    """(9, H*W) f32 0/1 masks: tap (dy,dx) valid iff (row+dy, col+dx) in-image."""
    hw = jnp.arange(H * W, dtype=jnp.int32)
    rows = hw // W
    cols = hw % W
    masks = []
    for ky in range(3):
        for kx in range(3):
            dy, dx = ky - 1, kx - 1
            valid = ((rows + dy >= 0) & (rows + dy < H)
                     & (cols + dx >= 0) & (cols + dx < W))
            masks.append(valid)
    return jnp.stack(masks).astype(jnp.float32)


def residual_forward(x_nchw, w3_oihw, w1_oihw, *, matmul_dtype=jnp.bfloat16):
    """x: (N,Cin,H,W); w3: (Crh,Cin,3,3); w1: (Cout,Crh,1,1). Requires Cout == Cin."""
    N, Cin, H, W = x_nchw.shape
    Crh = w3_oihw.shape[0]
    Cout = w1_oihw.shape[0]
    assert Cout == Cin, "residual add requires num_hiddens == in_channels"
    HW = H * W

    Nb = _pick_block_n(N)
    grid_len = N // Nb

    x2 = x_nchw.reshape(N, Cin, HW)              # merge trailing dims (no transpose)
    mask = _boundary_masks(H, W)                 # hoisted constant, fetched once
    # (Crh,Cin,3,3) -> (Crh,ky,kx,Cin) -> (Crh, 9*Cin): matches the in-kernel
    # tap order (ky-major, kx, Cin-minor).
    w3k = (jnp.transpose(w3_oihw, (0, 2, 3, 1))
           .reshape(Crh, 9 * Cin).astype(matmul_dtype))
    w1k = w1_oihw.reshape(Cout, Crh).astype(matmul_dtype)

    # NOTE: at realistic VQ-VAE widths (Cin=128, H=W=64) keep matmul_dtype=bf16
    # (or add an HW-tiling grid axis / raise vmem_limit_bytes) so the im2col
    # slab fits v7x's smaller VMEM scoped budget.
    out = pl.pallas_call(
        functools.partial(residual_kernel, W=W, matmul_dtype=matmul_dtype),
        out_shape=jax.ShapeDtypeStruct((N, Cout, HW), x_nchw.dtype),
        grid=(grid_len,),
        in_specs=[
            pl.BlockSpec((Nb, Cin, HW), lambda n: (n, 0, 0)),
            pl.BlockSpec((9, HW), lambda n: (0, 0)),
            pl.BlockSpec((Crh, 9 * Cin), lambda n: (0, 0)),
            pl.BlockSpec((Cout, Crh), lambda n: (0, 0)),
        ],
        out_specs=pl.BlockSpec((Nb, Cout, HW), lambda n: (n, 0, 0)),
        input_output_aliases={0: 0},
        compiler_params=pltpu.CompilerParams(
            dimension_semantics=("parallel",)),
    )(x2, mask, w3k, w1k)

    return out.reshape(N, Cout, H, W)


def reference_forward(x_nchw, w3_oihw, w1_oihw):
    """Plain-JAX f32 reference (conv_general_dilated, NCHW/OIHW) for correctness."""
    dn = ("NCHW", "OIHW", "NCHW")
    h = lax.conv_general_dilated(jnp.maximum(x_nchw, 0.0), w3_oihw,
                                 window_strides=(1, 1), padding="SAME",
                                 dimension_numbers=dn)
    h = jnp.maximum(h, 0.0)
    out = lax.conv_general_dilated(h, w1_oihw, window_strides=(1, 1),
                                   padding="VALID", dimension_numbers=dn)
    return x_nchw + out


if __name__ == "__main__":
    # Module hyperparameters (num_hiddens must equal in_channels so the
    # residual add is well-formed, as in VQ-VAE).
    in_channels = 8
    num_hiddens = 8
    num_residual_hiddens = 4
    N, H, W = 4, 16, 16          # Nb=2 images/step, grid=(2,): batched + 2-core

    key = jax.random.PRNGKey(0)
    kx, k3, k1 = jax.random.split(key, 3)

    x = jax.random.normal(kx, (N, in_channels, H, W), jnp.float32)
    w3 = jax.random.normal(
        k3, (num_residual_hiddens, in_channels, 3, 3), jnp.float32) * (
            1.0 / jnp.sqrt(9.0 * in_channels))
    w1 = jax.random.normal(
        k1, (num_hiddens, num_residual_hiddens, 1, 1), jnp.float32) * (
            1.0 / jnp.sqrt(float(num_residual_hiddens)))

    # Reference computed first (the kernel output aliases/donates its x view).
    ref = jax.block_until_ready(reference_forward(x, w3, w1))
    out = jax.block_until_ready(jax.jit(residual_forward)(x, w3, w1))

    assert out.shape == (N, num_hiddens, H, W)
    # bf16 matmul operands with f32 accumulation -> loosened tolerance.
    assert jnp.allclose(out, ref, atol=5e-2, rtol=5e-2), "mismatch vs reference"
    print("KERNEL_OK")
</pallas_src>

<mosaic_0001>
module attributes {stable_mosaic.version = 11 : i64} {
  func.func @residual_kernel(%arg0: i32, %arg1: memref<2x8x256xf32, #tpu.memory_space<vmem>>, %arg2: memref<9x256xf32, #tpu.memory_space<vmem>>, %arg3: memref<4x72xbf16, #tpu.memory_space<vmem>>, %arg4: memref<8x4xbf16, #tpu.memory_space<vmem>>, %arg5: memref<2x8x256xf32, #tpu.memory_space<vmem>>) attributes {dimension_semantics = [#tpu.dimension_semantics<parallel>], iteration_bounds = array<i64: 2>, scalar_prefetch = 0 : i64, scratch_operands = 0 : i64, tpu.core_type = #tpu.core_type<tc>, window_params = [{transform_indices = @transform_0, window_bounds = array<i64: 2, 8, 256>}, {pipeline_mode = #tpu.pipeline_mode<synchronous>, transform_indices = @transform_1, window_bounds = array<i64: 9, 256>}, {pipeline_mode = #tpu.pipeline_mode<synchronous>, transform_indices = @transform_2, window_bounds = array<i64: 4, 72>}, {pipeline_mode = #tpu.pipeline_mode<synchronous>, transform_indices = @transform_3, window_bounds = array<i64: 8, 4>}, {transform_indices = @transform_4, window_bounds = array<i64: 2, 8, 256>}]} {
    %c0 = arith.constant 0 : index
    %c0_0 = arith.constant 0 : index
    %c0_1 = arith.constant 0 : index
    %0 = vector.load %arg1[%c0, %c0_0, %c0_1] : memref<2x8x256xf32, #tpu.memory_space<vmem>>, vector<1x8x256xf32>
    %1 = vector.shape_cast %0 : vector<1x8x256xf32> to vector<8x256xf32>
    %cst = arith.constant 0.000000e+00 : f32
    %2 = vector.broadcast %cst : f32 to vector<8x256xf32>
    %3 = arith.maximumf %1, %2 : vector<8x256xf32>
    %c17_i32 = arith.constant 17 : i32
    %4 = tpu.dynamic_rotate %3 by %c17_i32 dim 1 : vector<8x256xf32>, i32 -> vector<8x256xf32>
    %c0_2 = arith.constant 0 : index
    %c0_3 = arith.constant 0 : index
    %5 = vector.load %arg2[%c0_2, %c0_3] : memref<9x256xf32, #tpu.memory_space<vmem>>, vector<1x256xf32>
    %6 = vector.broadcast %5 : vector<1x256xf32> to vector<8x256xf32>
    %7 = arith.mulf %4, %6 : vector<8x256xf32>
    %c16_i32 = arith.constant 16 : i32
    %8 = tpu.dynamic_rotate %3 by %c16_i32 dim 1 : vector<8x256xf32>, i32 -> vector<8x256xf32>
    %c1 = arith.constant 1 : index
    %c0_4 = arith.constant 0 : index
    %9 = vector.load %arg2[%c1, %c0_4] : memref<9x256xf32, #tpu.memory_space<vmem>>, vector<1x256xf32>
    %10 = vector.broadcast %9 : vector<1x256xf32> to vector<8x256xf32>
    %11 = arith.mulf %8, %10 : vector<8x256xf32>
    %c15_i32 = arith.constant 15 : i32
    %12 = tpu.dynamic_rotate %3 by %c15_i32 dim 1 : vector<8x256xf32>, i32 -> vector<8x256xf32>
    %c2 = arith.constant 2 : index
    %c0_5 = arith.constant 0 : index
    %13 = vector.load %arg2[%c2, %c0_5] : memref<9x256xf32, #tpu.memory_space<vmem>>, vector<1x256xf32>
    %14 = vector.broadcast %13 : vector<1x256xf32> to vector<8x256xf32>
    %15 = arith.mulf %12, %14 : vector<8x256xf32>
    %c1_i32 = arith.constant 1 : i32
    %16 = tpu.dynamic_rotate %3 by %c1_i32 dim 1 : vector<8x256xf32>, i32 -> vector<8x256xf32>
    %c3 = arith.constant 3 : index
    %c0_6 = arith.constant 0 : index
    %17 = vector.load %arg2[%c3, %c0_6] : memref<9x256xf32, #tpu.memory_space<vmem>>, vector<1x256xf32>
    %18 = vector.broadcast %17 : vector<1x256xf32> to vector<8x256xf32>
    %19 = arith.mulf %16, %18 : vector<8x256xf32>
    %c255_i32 = arith.constant 255 : i32
    %20 = tpu.dynamic_rotate %3 by %c255_i32 dim 1 : vector<8x256xf32>, i32 -> vector<8x256xf32>
    %c5 = arith.constant 5 : index
    %c0_7 = arith.constant 0 : index
    %21 = vector.load %arg2[%c5, %c0_7] : memref<9x256xf32, #tpu.memory_space<vmem>>, vector<1x256xf32>
    %22 = vector.broadcast %21 : vector<1x256xf32> to vector<8x256xf32>
    %23 = arith.mulf %20, %22 : vector<8x256xf32>
    %c241_i32 = arith.constant 241 : i32
    %24 = tpu.dynamic_rotate %3 by %c241_i32 dim 1 : vector<8x256xf32>, i32 -> vector<8x256xf32>
    %c6 = arith.constant 6 : index
    %c0_8 = arith.constant 0 : index
    %25 = vector.load %arg2[%c6, %c0_8] : memref<9x256xf32, #tpu.memory_space<vmem>>, vector<1x256xf32>
    %26 = vector.broadcast %25 : vector<1x256xf32> to vector<8x256xf32>
    %27 = arith.mulf %24, %26 : vector<8x256xf32>
    %c240_i32 = arith.constant 240 : i32
    %28 = tpu.dynamic_rotate %3 by %c240_i32 dim 1 : vector<8x256xf32>, i32 -> vector<8x256xf32>
    %c7 = arith.constant 7 : index
    %c0_9 = arith.constant 0 : index
    %29 = vector.load %arg2[%c7, %c0_9] : memref<9x256xf32, #tpu.memory_space<vmem>>, vector<1x256xf32>
    %30 = vector.broadcast %29 : vector<1x256xf32> to vector<8x256xf32>
    %31 = arith.mulf %28, %30 : vector<8x256xf32>
    %c239_i32 = arith.constant 239 : i32
    %32 = tpu.dynamic_rotate %3 by %c239_i32 dim 1 : vector<8x256xf32>, i32 -> vector<8x256xf32>
    %c8 = arith.constant 8 : index
    %c0_10 = arith.constant 0 : index
    %33 = vector.load %arg2[%c8, %c0_10] : memref<9x256xf32, #tpu.memory_space<vmem>>, vector<1x256xf32>
    %34 = vector.broadcast %33 : vector<1x256xf32> to vector<8x256xf32>
    %35 = arith.mulf %32, %34 : vector<8x256xf32>
    %36 = tpu.concatenate %7, %11, %15, %19, %3, %23, %27, %31, %35 in 0 : vector<8x256xf32>, vector<8x256xf32>, vector<8x256xf32>, vector<8x256xf32>, vector<8x256xf32>, vector<8x256xf32>, vector<8x256xf32>, vector<8x256xf32>, vector<8x256xf32> -> vector<72x256xf32>
    %37 = arith.truncf %36 : vector<72x256xf32> to vector<72x256xbf16>
    %c1_11 = arith.constant 1 : index
    %c0_12 = arith.constant 0 : index
    %c0_13 = arith.constant 0 : index
    %38 = vector.load %arg1[%c1_11, %c0_12, %c0_13] : memref<2x8x256xf32, #tpu.memory_space<vmem>>, vector<1x8x256xf32>
    %39 = vector.shape_cast %38 : vector<1x8x256xf32> to vector<8x256xf32>
    %cst_14 = arith.constant 0.000000e+00 : f32
    %40 = vector.broadcast %cst_14 : f32 to vector<8x256xf32>
    %41 = arith.maximumf %39, %40 : vector<8x256xf32>
    %c17_i32_15 = arith.constant 17 : i32
    %42 = tpu.dynamic_rotate %41 by %c17_i32_15 dim 1 : vector<8x256xf32>, i32 -> vector<8x256xf32>
    %c0_16 = arith.constant 0 : index
    %c0_17 = arith.constant 0 : index
    %43 = vector.load %arg2[%c0_16, %c0_17] : memref<9x256xf32, #tpu.memory_space<vmem>>, vector<1x256xf32>
    %44 = vector.broadcast %43 : vector<1x256xf32> to vector<8x256xf32>
    %45 = arith.mulf %42, %44 : vector<8x256xf32>
    %c16_i32_18 = arith.constant 16 : i32
    %46 = tpu.dynamic_rotate %41 by %c16_i32_18 dim 1 : vector<8x256xf32>, i32 -> vector<8x256xf32>
    %c1_19 = arith.constant 1 : index
    %c0_20 = arith.constant 0 : index
    %47 = vector.load %arg2[%c1_19, %c0_20] : memref<9x256xf32, #tpu.memory_space<vmem>>, vector<1x256xf32>
    %48 = vector.broadcast %47 : vector<1x256xf32> to vector<8x256xf32>
    %49 = arith.mulf %46, %48 : vector<8x256xf32>
    %c15_i32_21 = arith.constant 15 : i32
    %50 = tpu.dynamic_rotate %41 by %c15_i32_21 dim 1 : vector<8x256xf32>, i32 -> vector<8x256xf32>
    %c2_22 = arith.constant 2 : index
    %c0_23 = arith.constant 0 : index
    %51 = vector.load %arg2[%c2_22, %c0_23] : memref<9x256xf32, #tpu.memory_space<vmem>>, vector<1x256xf32>
    %52 = vector.broadcast %51 : vector<1x256xf32> to vector<8x256xf32>
    %53 = arith.mulf %50, %52 : vector<8x256xf32>
    %c1_i32_24 = arith.constant 1 : i32
    %54 = tpu.dynamic_rotate %41 by %c1_i32_24 dim 1 : vector<8x256xf32>, i32 -> vector<8x256xf32>
    %c3_25 = arith.constant 3 : index
    %c0_26 = arith.constant 0 : index
    %55 = vector.load %arg2[%c3_25, %c0_26] : memref<9x256xf32, #tpu.memory_space<vmem>>, vector<1x256xf32>
    %56 = vector.broadcast %55 : vector<1x256xf32> to vector<8x256xf32>
    %57 = arith.mulf %54, %56 : vector<8x256xf32>
    %c255_i32_27 = arith.constant 255 : i32
    %58 = tpu.dynamic_rotate %41 by %c255_i32_27 dim 1 : vector<8x256xf32>, i32 -> vector<8x256xf32>
    %c5_28 = arith.constant 5 : index
    %c0_29 = arith.constant 0 : index
    %59 = vector.load %arg2[%c5_28, %c0_29] : memref<9x256xf32, #tpu.memory_space<vmem>>, vector<1x256xf32>
    %60 = vector.broadcast %59 : vector<1x256xf32> to vector<8x256xf32>
    %61 = arith.mulf %58, %60 : vector<8x256xf32>
    %c241_i32_30 = arith.constant 241 : i32
    %62 = tpu.dynamic_rotate %41 by %c241_i32_30 dim 1 : vector<8x256xf32>, i32 -> vector<8x256xf32>
    %c6_31 = arith.constant 6 : index
    %c0_32 = arith.constant 0 : index
    %63 = vector.load %arg2[%c6_31, %c0_32] : memref<9x256xf32, #tpu.memory_space<vmem>>, vector<1x256xf32>
    %64 = vector.broadcast %63 : vector<1x256xf32> to vector<8x256xf32>
    %65 = arith.mulf %62, %64 : vector<8x256xf32>
    %c240_i32_33 = arith.constant 240 : i32
    %66 = tpu.dynamic_rotate %41 by %c240_i32_33 dim 1 : vector<8x256xf32>, i32 -> vector<8x256xf32>
    %c7_34 = arith.constant 7 : index
    %c0_35 = arith.constant 0 : index
    %67 = vector.load %arg2[%c7_34, %c0_35] : memref<9x256xf32, #tpu.memory_space<vmem>>, vector<1x256xf32>
    %68 = vector.broadcast %67 : vector<1x256xf32> to vector<8x256xf32>
    %69 = arith.mulf %66, %68 : vector<8x256xf32>
    %c239_i32_36 = arith.constant 239 : i32
    %70 = tpu.dynamic_rotate %41 by %c239_i32_36 dim 1 : vector<8x256xf32>, i32 -> vector<8x256xf32>
    %c8_37 = arith.constant 8 : index
    %c0_38 = arith.constant 0 : index
    %71 = vector.load %arg2[%c8_37, %c0_38] : memref<9x256xf32, #tpu.memory_space<vmem>>, vector<1x256xf32>
    %72 = vector.broadcast %71 : vector<1x256xf32> to vector<8x256xf32>
    %73 = arith.mulf %70, %72 : vector<8x256xf32>
    %74 = tpu.concatenate %45, %49, %53, %57, %41, %61, %65, %69, %73 in 0 : vector<8x256xf32>, vector<8x256xf32>, vector<8x256xf32>, vector<8x256xf32>, vector<8x256xf32>, vector<8x256xf32>, vector<8x256xf32>, vector<8x256xf32>, vector<8x256xf32> -> vector<72x256xf32>
    %75 = arith.truncf %74 : vector<72x256xf32> to vector<72x256xbf16>
    %76 = tpu.concatenate %37, %75 in 1 : vector<72x256xbf16>, vector<72x256xbf16> -> vector<72x512xbf16>
    %c0_39 = arith.constant 0 : index
    %c0_40 = arith.constant 0 : index
    %77 = vector.load %arg3[%c0_39, %c0_40] : memref<4x72xbf16, #tpu.memory_space<vmem>>, vector<4x72xbf16>
    %cst_41 = arith.constant dense<0.000000e+00> : vector<4x512xf32>
    %78 = tpu.matmul %77, %76, %cst_41 {dimension_numbers = #tpu.dot_dimension_numbers<[1], [0], [0], [1], [0, 0, 1, 1], [], []>} : vector<4x72xbf16>, vector<72x512xbf16>, vector<4x512xf32> -> vector<4x512xf32>
    %cst_42 = arith.constant 0.000000e+00 : f32
    %79 = vector.broadcast %cst_42 : f32 to vector<4x512xf32>
    %80 = arith.maximumf %78, %79 : vector<4x512xf32>
    %c0_43 = arith.constant 0 : index
    %c0_44 = arith.constant 0 : index
    %81 = vector.load %arg4[%c0_43, %c0_44] : memref<8x4xbf16, #tpu.memory_space<vmem>>, vector<8x4xbf16>
    %82 = arith.truncf %80 : vector<4x512xf32> to vector<4x512xbf16>
    %cst_45 = arith.constant dense<0.000000e+00> : vector<8x512xf32>
    %83 = tpu.matmul %81, %82, %cst_45 {dimension_numbers = #tpu.dot_dimension_numbers<[1], [0], [0], [1], [0, 0, 1, 1], [], []>} : vector<8x4xbf16>, vector<4x512xbf16>, vector<8x512xf32> -> vector<8x512xf32>
    %84 = vector.extract_strided_slice %83 {offsets = [0, 0], sizes = [8, 256], strides = [1, 1]} : vector<8x512xf32> to vector<8x256xf32>
    %85 = arith.addf %1, %84 : vector<8x256xf32>
    %c0_46 = arith.constant 0 : index
    %c0_47 = arith.constant 0 : index
    %c0_48 = arith.constant 0 : index
    %86 = vector.load %arg5[%c0_46, %c0_47, %c0_48] : memref<2x8x256xf32, #tpu.memory_space<vmem>>, vector<1x8x256xf32>
    %87 = vector.shape_cast %86 : vector<1x8x256xf32> to vector<8x256xf32>
    %88 = vector.shape_cast %85 : vector<8x256xf32> to vector<1x8x256xf32>
    tpu.vector_store %arg5[%c0_46, %c0_47, %c0_48], %88 {strides = array<i32>} : memref<2x8x256xf32, #tpu.memory_space<vmem>>, vector<1x8x256xf32>,
    %89 = vector.extract_strided_slice %83 {offsets = [0, 256], sizes = [8, 256], strides = [1, 1]} : vector<8x512xf32> to vector<8x256xf32>
    %90 = arith.addf %39, %89 : vector<8x256xf32>
    %c1_49 = arith.constant 1 : index
    %c0_50 = arith.constant 0 : index
    %c0_51 = arith.constant 0 : index
    %91 = vector.load %arg5[%c1_49, %c0_50, %c0_51] : memref<2x8x256xf32, #tpu.memory_space<vmem>>, vector<1x8x256xf32>
    %92 = vector.shape_cast %91 : vector<1x8x256xf32> to vector<8x256xf32>
    %93 = vector.shape_cast %90 : vector<8x256xf32> to vector<1x8x256xf32>
    tpu.vector_store %arg5[%c1_49, %c0_50, %c0_51], %93 {strides = array<i32>} : memref<2x8x256xf32, #tpu.memory_space<vmem>>, vector<1x8x256xf32>,
    return
  }
  func.func @transform_0(%arg0: i32) -> (i32, i32, i32) {
    %c0_i32 = arith.constant 0 : i32
    %c0_i32_0 = arith.constant 0 : i32
    %c0_i32_1 = arith.constant 0 : i32
    return %arg0, %c0_i32, %c0_i32_0 : i32, i32, i32
  }
  func.func @transform_1(%arg0: i32) -> (i32, i32) {
    %c0_i32 = arith.constant 0 : i32
    %c0_i32_0 = arith.constant 0 : i32
    %c0_i32_1 = arith.constant 0 : i32
    return %c0_i32, %c0_i32_0 : i32, i32
  }
  func.func @transform_2(%arg0: i32) -> (i32, i32) {
    %c0_i32 = arith.constant 0 : i32
    %c0_i32_0 = arith.constant 0 : i32
    %c0_i32_1 = arith.constant 0 : i32
    return %c0_i32, %c0_i32_0 : i32, i32
  }
  func.func @transform_3(%arg0: i32) -> (i32, i32) {
    %c0_i32 = arith.constant 0 : i32
    %c0_i32_0 = arith.constant 0 : i32
    %c0_i32_1 = arith.constant 0 : i32
    return %c0_i32, %c0_i32_0 : i32, i32
  }
  func.func @transform_4(%arg0: i32) -> (i32, i32, i32) {
    %c0_i32 = arith.constant 0 : i32
    %c0_i32_0 = arith.constant 0 : i32
    %c0_i32_1 = arith.constant 0 : i32
    return %arg0, %c0_i32, %c0_i32_0 : i32, i32, i32
  }
}

</mosaic_0001>

<llo_original>
// kernel: residual_forward.1
$region0: #{residual_forward.1}
  #allocation0 [shape = 'u32[]', space=smem, size = 0x4, offset = 0x4, fixed_abs, tag = 'smem constant byte address 0x4 - core index']
  #allocation1 [shape = 'u32[144,128]{1,0:T(1,128)}', space=vmem, size = 0x12000, scoped, tag = 'internal scratch']
  %s0 = inlined_call_operand.vmem [shape: f32[4,8,256], index: 0, kind: input, shape index: {}, may-alias: {0,4}]
  %s1 = inlined_call_operand.vmem [shape: f32[9,256], index: 1, kind: input, shape index: {}]
  %s2 = inlined_call_operand.vmem [shape: bf16[4,72], index: 2, kind: input, shape index: {}]
  %s3 = inlined_call_operand.vmem [shape: bf16[8,4], index: 3, kind: input, shape index: {}]
  %s4 = inlined_call_operand.vmem [shape: f32[4,8,256], index: 4, kind: output, shape index: {}, may-alias: {0,4}]
  %s5 = sld [smem:[#allocation0]]
  $region49: #{residual_forward.1} parent=0
    _
  %s7 = ssub.s32 1, %s5
  %s8 = scalar_select 0, %s7, %s5
  loop: start=0, step=1, limit=4
  $region2: #{residual_forward.1} parent=0 // loop_pre_header
    _
  $region3: #{residual_forward.1} parent=0 // loop_header
    %s10 = sphi 0, %s14
    %p11 = scmp.ge.s32.totalorder %s10, 4
    %s20 = sphi 0, %s22
    %s23 = sphi 0, %s20
    %s24 = sphi 0, %s23
    %s40 = sphi 0, %s24
    %s44 = sphi 0, %s44
    %s46 = sphi 0, %s44
    %s47 = sphi 0, %s46
    %s61 = sphi 0, %s47
    %s65 = sphi 0, %s65
    %s67 = sphi 0, %s65
    %s68 = sphi 0, %s67
    %s82 = sphi 0, %s68
    %s86 = sphi 0, %s86
    %s88 = sphi 0, %s86
    %s89 = sphi 0, %s88
    %s103 = sphi 0, %s89
    %s109 = sphi 0, %s111
    %s112 = sphi 0, %s109
    %s113 = sphi 0, %s112
    %s129 = sphi 0, %s113
  $region4: #{residual_forward.1} parent=0 // loop_header_branch
    %13 = sbr.rel (%p11) target = $region8
  $region5: #{residual_forward.1} parent=0 // loop_body
    %s15 = ssub.s32 %s10, 1
    %s16 = ssub.s32 %s10, 2
    %s17 = sadd.s32 %s10, 1
    %s18 = ssub.s32 %s10, %s17
    %p19 = scmp.eq.s32.totalorder %s18, 0
    %s21 = sadd.s32 %s20, 1
    %s22 = scalar_select %p19, %s20, %s21
    %p25 = pneg %p19
    %p26 = scmp.eq.s32.totalorder %s10, 1
    %p27 = por %p25, %p26
    %p28 = scmp.ne.s32.totalorder %s20, %s23
    %p29 = scmp.eq.s32.totalorder %s10, 0
    %p30 = por %p28, %p29
    %p31 = scmp.ne.s32.totalorder %s20, %s23
    %p32 = scmp.eq.s32.totalorder %s15, 1
    %p33 = por %p31, %p32
    %p34 = scmp.ne.s32.totalorder %s23, %s24
    %p35 = scmp.eq.s32.totalorder %s15, 0
    %p36 = por %p34, %p35
    %p37 = scmp.ne.s32.totalorder %s23, %s24
    %p38 = scmp.eq.s32.totalorder %s16, 1
    %p39 = por %p37, %p38
    %p41 = scmp.ne.s32.totalorder %s24, %s40
    %p42 = scmp.eq.s32.totalorder %s16, 0
    %p43 = por %p41, %p42
    %s45 = sadd.s32 %s44, 1
    %p48 = scmp.eq.s32.totalorder %s10, 1
    %p49 = scmp.ne.s32.totalorder %s44, %s46
    %p50 = scmp.eq.s32.totalorder %s10, 0
    %p51 = por %p49, %p50
    %p52 = scmp.ne.s32.totalorder %s44, %s46
    %p53 = scmp.eq.s32.totalorder %s15, 1
    %p54 = por %p52, %p53
    %p55 = scmp.ne.s32.totalorder %s46, %s47
    %p56 = scmp.eq.s32.totalorder %s15, 0
    %p57 = por %p55, %p56
    %p58 = scmp.ne.s32.totalorder %s46, %s47
    %p59 = scmp.eq.s32.totalorder %s16, 1
    %p60 = por %p58, %p59
    %p62 = scmp.ne.s32.totalorder %s47, %s61
    %p63 = scmp.eq.s32.totalorder %s16, 0
    %p64 = por %p62, %p63
    %s66 = sadd.s32 %s65, 1
    %p69 = scmp.eq.s32.totalorder %s10, 1
    %p70 = scmp.ne.s32.totalorder %s65, %s67
    %p71 = scmp.eq.s32.totalorder %s10, 0
    %p72 = por %p70, %p71
    %p73 = scmp.ne.s32.totalorder %s65, %s67
    %p74 = scmp.eq.s32.totalorder %s15, 1
    %p75 = por %p73, %p74
    %p76 = scmp.ne.s32.totalorder %s67, %s68
    %p77 = scmp.eq.s32.totalorder %s15, 0
    %p78 = por %p76, %p77
    %p79 = scmp.ne.s32.totalorder %s67, %s68
    %p80 = scmp.eq.s32.totalorder %s16, 1
    %p81 = por %p79, %p80
    %p83 = scmp.ne.s32.totalorder %s68, %s82
    %p84 = scmp.eq.s32.totalorder %s16, 0
    %p85 = por %p83, %p84
    %s87 = sadd.s32 %s86, 1
    %p90 = scmp.eq.s32.totalorder %s10, 1
    %p91 = scmp.ne.s32.totalorder %s86, %s88
    %p92 = scmp.eq.s32.totalorder %s10, 0
    %p93 = por %p91, %p92
    %p94 = scmp.ne.s32.totalorder %s86, %s88
    %p95 = scmp.eq.s32.totalorder %s15, 1
    %p96 = por %p94, %p95
    %p97 = scmp.ne.s32.totalorder %s88, %s89
    %p98 = scmp.eq.s32.totalorder %s15, 0
    %p99 = por %p97, %p98
    %p100 = scmp.ne.s32.totalorder %s88, %s89
    %p101 = scmp.eq.s32.totalorder %s16, 1
    %p102 = por %p100, %p101
    %p104 = scmp.ne.s32.totalorder %s89, %s103
    %p105 = scmp.eq.s32.totalorder %s16, 0
    %p106 = por %p104, %p105
    %s107 = ssub.s32 %s10, %s17
    %p108 = scmp.eq.s32.totalorder %s107, 0
    %s110 = sadd.s32 %s109, 1
    %s111 = scalar_select %p108, %s109, %s110
    %p114 = pneg %p108
    %p115 = scmp.eq.s32.totalorder %s10, 1
    %p116 = por %p114, %p115
    %p117 = scmp.ne.s32.totalorder %s109, %s112
    %p118 = scmp.eq.s32.totalorder %s10, 0
    %p119 = por %p117, %p118
    %p120 = scmp.ne.s32.totalorder %s109, %s112
    %p121 = scmp.eq.s32.totalorder %s15, 1
    %p122 = por %p120, %p121
    %p123 = scmp.ne.s32.totalorder %s112, %s113
    %p124 = scmp.eq.s32.totalorder %s15, 0
    %p125 = por %p123, %p124
    %p126 = scmp.ne.s32.totalorder %s112, %s113
    %p127 = scmp.eq.s32.totalorder %s16, 1
    %p128 = por %p126, %p127
    %p130 = scmp.ne.s32.totalorder %s113, %s129
    %p131 = scmp.eq.s32.totalorder %s16, 0
    %p132 = por %p130, %p131
    %p133 = scmp.le.s32.totalorder 1, %s10
    %p134 = scmp.lt.s32.totalorder %s10, 3
    %p135 = pnand %p133, %p134
    %p136 = pneg %p135
    // Predicated region
    $region9: #{residual_forward.1} parent=5 // pred_check
      _
    $region10: #{residual_forward.1} parent=5 // pred_check_branch
      %138 = sbr.rel (%p135) target = $region12
    $region11: #{residual_forward.1} parent=5 // pred_region
      %s139 = ssub.s32 %s10, 1
      // Predicated region
      $region13: #{residual_forward.1} parent=11 // pred_check
        %p140 = pneg %p57
      $region14: #{residual_forward.1} parent=11 // pred_check_branch
        %142 = sbr.rel (%p140) target = $region16
      $region15: #{residual_forward.1} parent=11 // pred_region
        _
      $region16: #{residual_forward.1} parent=11 // pred_fallthru
        _
      // Predicated region
      $region17: #{residual_forward.1} parent=11 // pred_check
        %p143 = pneg %p78
      $region18: #{residual_forward.1} parent=11 // pred_check_branch
        %145 = sbr.rel (%p143) target = $region20
      $region19: #{residual_forward.1} parent=11 // pred_region
        _
      $region20: #{residual_forward.1} parent=11 // pred_fallthru
        _
      // Predicated region
      $region21: #{residual_forward.1} parent=11 // pred_check
        %p146 = pneg %p99
      $region22: #{residual_forward.1} parent=11 // pred_check_branch
        %148 = sbr.rel (%p146) target = $region24
      $region23: #{residual_forward.1} parent=11 // pred_region
        _
      $region24: #{residual_forward.1} parent=11 // pred_fallthru
        _
    $region12: #{residual_forward.1} parent=5 // pred_fallthru
      _
    %p149 = scmp.lt.s32.totalorder %s10, 2
    // Predicated region
    $region25: #{residual_forward.1} parent=5 // pred_check
      %p150 = pneg %p149
    $region26: #{residual_forward.1} parent=5 // pred_check_branch
      %152 = sbr.rel (%p150) target = $region28
    $region27: #{residual_forward.1} parent=5 // pred_region
      // Predicated region
      $region29: #{residual_forward.1} parent=27 // pred_check
        %p153 = pneg %p30
      $region30: #{residual_forward.1} parent=27 // pred_check_branch
        %155 = sbr.rel (%p153) target = $region32
      $region31: #{residual_forward.1} parent=27 // pred_region
        %s156 = smul.u32 2, %s10
        %p157 = scmp.lt.s32.totalorder %s156, 3
        %s158 = scalar_select %p157, %s156, 3
        %s159 = smul.addr %s158, 2
        %s160 = smul.addr %s159, 8
        %s161 = scalar_lea.vmem %s0, %s160
        %s162 = smul.u32 2, %s10
      $region32: #{residual_forward.1} parent=27 // pred_fallthru
        _
    $region28: #{residual_forward.1} parent=5 // pred_fallthru
      _
    %p163 = scmp.le.s32.totalorder 1, %s10
    %p164 = scmp.lt.s32.totalorder %s10, 3
    %p165 = pnand %p163, %p164
    %p166 = pneg %p165
    // Predicated region
    $region33: #{residual_forward.1} parent=5 // pred_check
      _
    $region34: #{residual_forward.1} parent=5 // pred_check_branch
      %168 = sbr.rel (%p165) target = $region36
    $region35: #{residual_forward.1} parent=5 // pred_region
      %s169 = ssub.s32 %s10, 1
      %s170 = smul.u32 2, %s15
      %p171 = scmp.lt.s32.totalorder %s170, 3
      %s172 = scalar_select %p171, %s170, 3
      %s173 = smul.addr %s172, 2
      %s174 = smul.addr %s173, 8
      %s175 = scalar_lea.vmem %s0, %s174
      %p176 = pneg %p36
      %p177 = pneg %p33
      %p178 = pneg %p57
      %p179 = pneg %p54
      %p180 = pneg %p78
      %p181 = pneg %p75
      %p182 = pneg %p99
      %p183 = pneg %p96
      %p184 = pneg %p125
      %p185 = pneg %p122
      %s186 = smul.u32 2, %s15
      %p187 = scmp.lt.s32.totalorder %s186, 3
      %s188 = scalar_select %p187, %s186, 3
      %s189 = smul.addr %s188, 2
      %s190 = smul.addr %s189, 8
      %s191 = scalar_lea.vmem %s4, %s190
      %s192 = smul.u32 2, %s15
      %p193 = scmp.lt.s32.totalorder %s192, 3
      %s194 = scalar_select %p193, %s192, 3
      %s195 = smul.addr %s194, 2
      %s196 = smul.addr %s195, 8
      %s197 = scalar_lea.vmem %s0, %s196
      %s198 = smul.u32 2, %s15
      %s199 = smul.u32 2, %s15
      %p200 = scmp.lt.s32.totalorder %s199, 3
      %s201 = scalar_select %p200, %s199, 3
      %s202 = smul.addr %s201, 2
      %s203 = smul.addr %s202, 8
      %s204 = scalar_lea.vmem %s4, %s203
      %s205 = smul.u32 2, %s15
      %v207 = vld [vmem:[%s197] sm:$0xff]
      %v208 = vld [vmem:[%s197 + $0x8] sm:$0xff]
      %v209 = vmax.f32 %v207, 0.0
      %v210 = vmax.f32 %v208, 0.0
      %211 = vrot.lane.b32.xlu0 %v209, 17
      %v212 = vpop.permute.xlu0 %211
      %213 = vrot.lane.b32.xlu0 %v210, 17
      %v214 = vpop.permute.xlu0 %213
      %v215 = vlaneseq
      %v216 = vand.u32 %v215, 127
      %vm217 = vcmp.lt.s32.totalorder %v216, 17
      %v218 = vsel %vm217, %v212, %v214
      %v219 = vsel %vm217, %v214, %v212
      %v220 = vld [vmem:[%s1] ss:$8 sm:$0x3]
      %v222 = vlaneseq
      %v223 = vshrl.u32 %v222, 7
      %v224 = vsub.s32 0, %v223
      %v225 = vrot.slane %v220, %v224
      %v226 = vlaneseq
      %v227 = vshrl.u32 %v226, 7
      %v228 = vsub.s32 1, %v227
      %v229 = vrot.slane %v220, %v228
      %v232 = vmul.f32 %v219, %v225
      %v233 = vmul.f32 %v218, %v229
      %234 = vrot.lane.b32.xlu0 %v209, 16
      %v235 = vpop.permute.xlu0 %234
      %236 = vrot.lane.b32.xlu0 %v210, 16
      %v237 = vpop.permute.xlu0 %236
      %vm238 = vcmp.lt.s32.totalorder %v216, 16
      %v239 = vsel %vm238, %v235, %v237
      %v240 = vsel %vm238, %v237, %v235
      %s241 = scalar_lea.vmem %s1, 1
      %v242 = vld [vmem:[%s241] ss:$8 sm:$0x3]
      %v244 = vlaneseq
      %v245 = vshrl.u32 %v244, 7
      %v246 = vsub.s32 0, %v245
      %v247 = vrot.slane %v242, %v246
      %v248 = vlaneseq
      %v249 = vshrl.u32 %v248, 7
      %v250 = vsub.s32 1, %v249
      %v251 = vrot.slane %v242, %v250
      %v254 = vmul.f32 %v240, %v247
      %v255 = vmul.f32 %v239, %v251
      %256 = vrot.lane.b32.xlu0 %v209, 15
      %v257 = vpop.permute.xlu0 %256
      %258 = vrot.lane.b32.xlu0 %v210, 15
      %v259 = vpop.permute.xlu0 %258
      %vm260 = vcmp.lt.s32.totalorder %v216, 15
      %v261 = vsel %vm260, %v257, %v259
      %v262 = vsel %vm260, %v259, %v257
      %s263 = scalar_lea.vmem %s1, 2
      %v264 = vld [vmem:[%s263] ss:$8 sm:$0x3]
      %v266 = vlaneseq
      %v267 = vshrl.u32 %v266, 7
      %v268 = vsub.s32 0, %v267
      %v269 = vrot.slane %v264, %v268
      %v270 = vlaneseq
      %v271 = vshrl.u32 %v270, 7
      %v272 = vsub.s32 1, %v271
      %v273 = vrot.slane %v264, %v272
      %v276 = vmul.f32 %v262, %v269
      %v277 = vmul.f32 %v261, %v273
      %278 = vrot.lane.b32.xlu0 %v209, 1
      %v279 = vpop.permute.xlu0 %278
      %280 = vrot.lane.b32.xlu0 %v210, 1
      %v281 = vpop.permute.xlu0 %280
      %vm282 = vcmp.lt.s32.totalorder %v216, 1
      %v283 = vsel %vm282, %v279, %v281
      %v284 = vsel %vm282, %v281, %v279
      %s285 = scalar_lea.vmem %s1, 3
      %v286 = vld [vmem:[%s285] ss:$8 sm:$0x3]
      %v288 = vlaneseq
      %v289 = vshrl.u32 %v288, 7
      %v290 = vsub.s32 0, %v289
      %v291 = vrot.slane %v286, %v290
      %v292 = vlaneseq
      %v293 = vshrl.u32 %v292, 7
      %v294 = vsub.s32 1, %v293
      %v295 = vrot.slane %v286, %v294
      %v298 = vmul.f32 %v284, %v291
      %v299 = vmul.f32 %v283, %v295
      %300 = vrot.lane.b32.xlu0 %v209, 127
      %v301 = vpop.permute.xlu0 %300
      %302 = vrot.lane.b32.xlu0 %v210, 127
      %v303 = vpop.permute.xlu0 %302
      %vm304 = vcmp.lt.s32.totalorder %v216, 127
      %v305 = vsel %vm304, %v301, %v303
      %v306 = vsel %vm304, %v303, %v301
      %s307 = scalar_lea.vmem %s1, 5
      %v308 = vld [vmem:[%s307] ss:$8 sm:$0x3]
      %v310 = vlaneseq
      %v311 = vshrl.u32 %v310, 7
      %v312 = vsub.s32 0, %v311
      %v313 = vrot.slane %v308, %v312
      %v314 = vlaneseq
      %v315 = vshrl.u32 %v314, 7
      %v316 = vsub.s32 1, %v315
      %v317 = vrot.slane %v308, %v316
      %v320 = vmul.f32 %v305, %v313
      %v321 = vmul.f32 %v306, %v317
      %322 = vrot.lane.b32.xlu0 %v209, 113
      %v323 = vpop.permute.xlu0 %322
      %324 = vrot.lane.b32.xlu0 %v210, 113
      %v325 = vpop.permute.xlu0 %324
      %vm326 = vcmp.lt.s32.totalorder %v216, 113
      %v327 = vsel %vm326, %v323, %v325
      %v328 = vsel %vm326, %v325, %v323
      %s329 = scalar_lea.vmem %s1, 6
      %v330 = vld [vmem:[%s329] ss:$8 sm:$0x3]
      %v332 = vlaneseq
      %v333 = vshrl.u32 %v332, 7
      %v334 = vsub.s32 0, %v333
      %v335 = vrot.slane %v330, %v334
      %v336 = vlaneseq
      %v337 = vshrl.u32 %v336, 7
      %v338 = vsub.s32 1, %v337
      %v339 = vrot.slane %v330, %v338
      %v342 = vmul.f32 %v327, %v335
      %v343 = vmul.f32 %v328, %v339
      %344 = vrot.lane.b32.xlu0 %v209, 112
      %v345 = vpop.permute.xlu0 %344
      %346 = vrot.lane.b32.xlu0 %v210, 112
      %v347 = vpop.permute.xlu0 %346
      %vm348 = vcmp.lt.s32.totalorder %v216, 112
      %v349 = vsel %vm348, %v345, %v347
      %v350 = vsel %vm348, %v347, %v345
      %s351 = scalar_lea.vmem %s1, 7
      %v352 = vld [vmem:[%s351] ss:$8 sm:$0x3]
      %v354 = vlaneseq
      %v355 = vshrl.u32 %v354, 7
      %v356 = vsub.s32 0, %v355
      %v357 = vrot.slane %v352, %v356
      %v358 = vlaneseq
      %v359 = vshrl.u32 %v358, 7
      %v360 = vsub.s32 1, %v359
      %v361 = vrot.slane %v352, %v360
      %v364 = vmul.f32 %v349, %v357
      %v365 = vmul.f32 %v350, %v361
      %366 = vrot.lane.b32.xlu0 %v209, 111
      %v367 = vpop.permute.xlu0 %366
      %368 = vrot.lane.b32.xlu0 %v210, 111
      %v369 = vpop.permute.xlu0 %368
      %vm370 = vcmp.lt.s32.totalorder %v216, 111
      %v371 = vsel %vm370, %v367, %v369
      %v372 = vsel %vm370, %v369, %v367
      %s373 = scalar_lea.vmem %s1, 16
      %v374 = vld [vmem:[%s373] ss:$8 sm:$0x3]
      %v376 = vlaneseq
      %v377 = vshrl.u32 %v376, 7
      %v378 = vsub.s32 0, %v377
      %v379 = vrot.slane %v374, %v378
      %v380 = vlaneseq
      %v381 = vshrl.u32 %v380, 7
      %v382 = vsub.s32 1, %v381
      %v383 = vrot.slane %v374, %v382
      %v386 = vmul.f32 %v371, %v379
      %v387 = vmul.f32 %v372, %v383
      %v388 = vpack.c.bf16 %v254, %v232
      %v389 = vpack.c.bf16 %v255, %v233
      %v390 = vpack.c.bf16 %v298, %v276
      %v391 = vpack.c.bf16 %v299, %v277
      %v392 = vpack.c.bf16 %v320, %v209
      %v393 = vpack.c.bf16 %v321, %v210
      %v394 = vpack.c.bf16 %v364, %v342
      %v395 = vpack.c.bf16 %v365, %v343
      %v396 = vpack.c.bf16 %v386, %v386
      %v397 = vpack.c.bf16 %v387, %v387
      %s398 = scalar_lea.vmem %s197, 16
      %v399 = vld [vmem:[%s398] sm:$0xff]
      %v400 = vld [vmem:[%s398 + $0x8] sm:$0xff]
      %v401 = vmax.f32 %v399, 0.0
      %v402 = vmax.f32 %v400, 0.0
      %403 = vrot.lane.b32.xlu0 %v401, 17
      %v404 = vpop.permute.xlu0 %403
      %405 = vrot.lane.b32.xlu0 %v402, 17
      %v406 = vpop.permute.xlu0 %405
      %v407 = vsel %vm217, %v404, %v406
      %v408 = vsel %vm217, %v406, %v404
      %v409 = vmul.f32 %v408, %v225
      %v410 = vmul.f32 %v407, %v229
      %411 = vrot.lane.b32.xlu0 %v401, 16
      %v412 = vpop.permute.xlu0 %411
      %413 = vrot.lane.b32.xlu0 %v402, 16
      %v414 = vpop.permute.xlu0 %413
      %v415 = vsel %vm238, %v412, %v414
      %v416 = vsel %vm238, %v414, %v412
      %v417 = vmul.f32 %v416, %v247
      %v418 = vmul.f32 %v415, %v251
      %419 = vrot.lane.b32.xlu0 %v401, 15
      %v420 = vpop.permute.xlu0 %419
      %421 = vrot.lane.b32.xlu0 %v402, 15
      %v422 = vpop.permute.xlu0 %421
      %v423 = vsel %vm260, %v420, %v422
      %v424 = vsel %vm260, %v422, %v420
      %v425 = vmul.f32 %v424, %v269
      %v426 = vmul.f32 %v423, %v273
      %427 = vrot.lane.b32.xlu0 %v401, 1
      %v428 = vpop.permute.xlu0 %427
      %429 = vrot.lane.b32.xlu0 %v402, 1
      %v430 = vpop.permute.xlu0 %429
      %v431 = vsel %vm282, %v428, %v430
      %v432 = vsel %vm282, %v430, %v428
      %v433 = vmul.f32 %v432, %v291
      %v434 = vmul.f32 %v431, %v295
      %435 = vrot.lane.b32.xlu0 %v401, 127
      %v436 = vpop.permute.xlu0 %435
      %437 = vrot.lane.b32.xlu0 %v402, 127
      %v438 = vpop.permute.xlu0 %437
      %v439 = vsel %vm304, %v436, %v438
      %v440 = vsel %vm304, %v438, %v436
      %v441 = vmul.f32 %v439, %v313
      %v442 = vmul.f32 %v440, %v317
      %443 = vrot.lane.b32.xlu0 %v401, 113
      %v444 = vpop.permute.xlu0 %443
      %445 = vrot.lane.b32.xlu0 %v402, 113
      %v446 = vpop.permute.xlu0 %445
      %v447 = vsel %vm326, %v444, %v446
      %v448 = vsel %vm326, %v446, %v444
      %v449 = vmul.f32 %v447, %v335
      %v450 = vmul.f32 %v448, %v339
      %451 = vrot.lane.b32.xlu0 %v401, 112
      %v452 = vpop.permute.xlu0 %451
      %453 = vrot.lane.b32.xlu0 %v402, 112
      %v454 = vpop.permute.xlu0 %453
      %v455 = vsel %vm348, %v452, %v454
      %v456 = vsel %vm348, %v454, %v452
      %v457 = vmul.f32 %v455, %v357
      %v458 = vmul.f32 %v456, %v361
      %459 = vrot.lane.b32.xlu0 %v401, 111
      %v460 = vpop.permute.xlu0 %459
      %461 = vrot.lane.b32.xlu0 %v402, 111
      %v462 = vpop.permute.xlu0 %461
      %v463 = vsel %vm370, %v460, %v462
      %v464 = vsel %vm370, %v462, %v460
      %v465 = vmul.f32 %v463, %v379
      %v466 = vmul.f32 %v464, %v383
      %v467 = vpack.c.bf16 %v417, %v409
      %v468 = vpack.c.bf16 %v418, %v410
      %v469 = vpack.c.bf16 %v433, %v425
      %v470 = vpack.c.bf16 %v434, %v426
      %v471 = vpack.c.bf16 %v441, %v401
      %v472 = vpack.c.bf16 %v442, %v402
      %v473 = vpack.c.bf16 %v457, %v449
      %v474 = vpack.c.bf16 %v458, %v450
      %v475 = vpack.c.bf16 %v465, %v465
      %v476 = vpack.c.bf16 %v466, %v466
      %v477 = vld [vmem:[%s2] sm:$0x3]
      %vm478 = vcmask 588800
      %v480 = vsel %vm478, %v477, 0
      %vm482 = vcmask 1043456
      %v484 = vsel %vm482, %v396, 0
      %v487 = vsel %vm482, %v397, 0
      %v490 = vsel %vm482, %v475, 0
      %v493 = vsel %vm482, %v476, 0
      %495 = vmatprep.subr.bf16.mxu0 %v389
      %496 = vmatpush1.bf16.msra.mxu0 %v388
      %497 = vmatprep.subr.bf16.mxu0 %v391
      %498 = vmatpush1.bf16.msra.mxu0 %v390
      %499 = vmatprep.subr.bf16.mxu0 %v393
      %500 = vmatpush1.bf16.msra.mxu0 %v392
      %501 = vmatprep.subr.bf16.mxu0 %v395
      %502 = vmatpush1.bf16.msra.mxu0 %v394
      %503 = vmatprep.subr.bf16.mxu0 %v487
      %504 = vmatpush1.bf16.msra.mxu0 %v484
      %505 = vmatprep.subr.bf16.mxu0 0
      %506 = vmatpush1.bf16.msra.mxu0 0
      %507 = vmatprep.subr.bf16.mxu0 0
      %508 = vmatpush1.bf16.msra.mxu0 0
      %509 = vmatprep.subr.bf16.mxu0 0
      %510 = vmatpush1.bf16.msra.mxu0 0
      %511 = vmatprep.subr.bf16.mxu0 0
      %512 = vmatpush1.bf16.msra.mxu0 0
      %513 = vmatprep.subr.bf16.mxu0 0
      %514 = vmatpush1.bf16.msra.mxu0 0
      %515 = vmatprep.subr.bf16.mxu0 0
      %516 = vmatpush1.bf16.msra.mxu0 0
      %517 = vmatprep.subr.bf16.mxu0 0
      %518 = vmatpush1.bf16.msra.mxu0 0
      %519 = vmatprep.subr.bf16.mxu0 0
      %520 = vmatpush1.bf16.msra.mxu0 0
      %521 = vmatprep.subr.bf16.mxu0 0
      %522 = vmatpush1.bf16.msra.mxu0 0
      %523 = vmatprep.subr.bf16.mxu0 0
      %524 = vmatpush1.bf16.msra.mxu0 0
      %525 = vmatprep.subr.bf16.mxu0 0
      %526 = vmatpush1.bf16.msra.mxu0 0
      %527 = vmatprep.mubr.bf16.mxu0 0
      %528 = vmatmul.mubr.bf16.gmra.mrb[0].mxu0 %v480
      %v529 = vpop.f32.mrb[0].mxu0
      %v530 = vadd.f32 0.0, %v529
      %v531 = vpop.f32.mrb[0].mxu0
      %v532 = vadd.f32 0.0, %v531
      %v533 = vpop.f32.mrb[0].mxu0
      %v534 = vpop.f32.mrb[0].mxu0
      %535 = vdwg.mxu0
      %536 = vmatprep.subr.bf16.mxu0 %v468
      %537 = vmatpush1.bf16.msra.mxu0 %v467
      %538 = vmatprep.subr.bf16.mxu0 %v470
      %539 = vmatpush1.bf16.msra.mxu0 %v469
      %540 = vmatprep.subr.bf16.mxu0 %v472
      %541 = vmatpush1.bf16.msra.mxu0 %v471
      %542 = vmatprep.subr.bf16.mxu0 %v474
      %543 = vmatpush1.bf16.msra.mxu0 %v473
      %544 = vmatprep.subr.bf16.mxu0 %v493
      %545 = vmatpush1.bf16.msra.mxu0 %v490
      %546 = vmatprep.subr.bf16.mxu0 0
      %547 = vmatpush1.bf16.msra.mxu0 0
      %548 = vmatprep.subr.bf16.mxu0 0
      %549 = vmatpush1.bf16.msra.mxu0 0
      %550 = vmatprep.subr.bf16.mxu0 0
      %551 = vmatpush1.bf16.msra.mxu0 0
      %552 = vmatprep.subr.bf16.mxu0 0
      %553 = vmatpush1.bf16.msra.mxu0 0
      %554 = vmatprep.subr.bf16.mxu0 0
      %555 = vmatpush1.bf16.msra.mxu0 0
      %556 = vmatprep.subr.bf16.mxu0 0
      %557 = vmatpush1.bf16.msra.mxu0 0
      %558 = vmatprep.subr.bf16.mxu0 0
      %559 = vmatpush1.bf16.msra.mxu0 0
      %560 = vmatprep.subr.bf16.mxu0 0
      %561 = vmatpush1.bf16.msra.mxu0 0
      %562 = vmatprep.subr.bf16.mxu0 0
      %563 = vmatpush1.bf16.msra.mxu0 0
      %564 = vmatprep.subr.bf16.mxu0 0
      %565 = vmatpush1.bf16.msra.mxu0 0
      %566 = vmatprep.subr.bf16.mxu0 0
      %567 = vmatpush1.bf16.msra.mxu0 0
      %568 = vmatprep.mubr.bf16.mxu0 0
      %569 = vmatmul.mubr.bf16.gmra.mrb[0].mxu0 %v480
      %v570 = vpop.f32.mrb[0].mxu0
      %v571 = vadd.f32 0.0, %v570
      %v572 = vpop.f32.mrb[0].mxu0
      %v573 = vadd.f32 0.0, %v572
      %v574 = vpop.f32.mrb[0].mxu0
      %v575 = vpop.f32.mrb[0].mxu0
      %576 = vdwg.mxu0
      %v577 = vmax.f32 %v530, 0.0
      %v578 = vmax.f32 %v532, 0.0
      %v579 = vmax.f32 %v571, 0.0
      %v580 = vmax.f32 %v573, 0.0
      %v581 = vld [vmem:[%s3] sm:$0xf]
      %v582 = vpack.c.bf16 %v577, %v577
      %v583 = vpack.c.bf16 %v578, %v578
      %v584 = vpack.c.bf16 %v579, %v579
      %v585 = vpack.c.bf16 %v580, %v580
      %vm586 = vcmask 31744
      %v588 = vsel %vm586, %v581, 0
      %vm590 = vcmask 1041408
      %v592 = vsel %vm590, %v582, 0
      %v595 = vsel %vm590, %v583, 0
      %v598 = vsel %vm590, %v584, 0
      %v601 = vsel %vm590, %v585, 0
      %603 = vmatprep.subr.bf16.mxu0 %v595
      %604 = vmatpush1.bf16.msra.mxu0 %v592
      %605 = vmatprep.subr.bf16.mxu0 0
      %606 = vmatpush1.bf16.msra.mxu0 0
      %607 = vmatprep.subr.bf16.mxu0 0
      %608 = vmatpush1.bf16.msra.mxu0 0
      %609 = vmatprep.subr.bf16.mxu0 0
      %610 = vmatpush1.bf16.msra.mxu0 0
      %611 = vmatprep.subr.bf16.mxu0 0
      %612 = vmatpush1.bf16.msra.mxu0 0
      %613 = vmatprep.subr.bf16.mxu0 0
      %614 = vmatpush1.bf16.msra.mxu0 0
      %615 = vmatprep.subr.bf16.mxu0 0
      %616 = vmatpush1.bf16.msra.mxu0 0
      %617 = vmatprep.subr.bf16.mxu0 0
      %618 = vmatpush1.bf16.msra.mxu0 0
      %619 = vmatprep.subr.bf16.mxu0 0
      %620 = vmatpush1.bf16.msra.mxu0 0
      %621 = vmatprep.subr.bf16.mxu0 0
      %622 = vmatpush1.bf16.msra.mxu0 0
      %623 = vmatprep.subr.bf16.mxu0 0
      %624 = vmatpush1.bf16.msra.mxu0 0
      %625 = vmatprep.subr.bf16.mxu0 0
      %626 = vmatpush1.bf16.msra.mxu0 0
      %627 = vmatprep.subr.bf16.mxu0 0
      %628 = vmatpush1.bf16.msra.mxu0 0
      %629 = vmatprep.subr.bf16.mxu0 0
      %630 = vmatpush1.bf16.msra.mxu0 0
      %631 = vmatprep.subr.bf16.mxu0 0
      %632 = vmatpush1.bf16.msra.mxu0 0
      %633 = vmatprep.subr.bf16.mxu0 0
      %634 = vmatpush1.bf16.msra.mxu0 0
      %635 = vmatprep.mubr.bf16.mxu0 0
      %636 = vmatmul.mubr.bf16.gmra.mrb[0].mxu0 %v588
      %v637 = vpop.f32.mrb[0].mxu0
      %v638 = vadd.f32 0.0, %v637
      %v639 = vpop.f32.mrb[0].mxu0
      %v640 = vadd.f32 0.0, %v639
      %v641 = vpop.f32.mrb[0].mxu0
      %v642 = vpop.f32.mrb[0].mxu0
      %643 = vdwg.mxu0
      %644 = vmatprep.subr.bf16.mxu0 %v601
      %645 = vmatpush1.bf16.msra.mxu0 %v598
      %646 = vmatprep.subr.bf16.mxu0 0
      %647 = vmatpush1.bf16.msra.mxu0 0
      %648 = vmatprep.subr.bf16.mxu0 0
      %649 = vmatpush1.bf16.msra.mxu0 0
      %650 = vmatprep.subr.bf16.mxu0 0
      %651 = vmatpush1.bf16.msra.mxu0 0
      %652 = vmatprep.subr.bf16.mxu0 0
      %653 = vmatpush1.bf16.msra.mxu0 0
      %654 = vmatprep.subr.bf16.mxu0 0
      %655 = vmatpush1.bf16.msra.mxu0 0
      %656 = vmatprep.subr.bf16.mxu0 0
      %657 = vmatpush1.bf16.msra.mxu0 0
      %658 = vmatprep.subr.bf16.mxu0 0
      %659 = vmatpush1.bf16.msra.mxu0 0
      %660 = vmatprep.subr.bf16.mxu0 0
      %661 = vmatpush1.bf16.msra.mxu0 0
      %662 = vmatprep.subr.bf16.mxu0 0
      %663 = vmatpush1.bf16.msra.mxu0 0
      %664 = vmatprep.subr.bf16.mxu0 0
      %665 = vmatpush1.bf16.msra.mxu0 0
      %666 = vmatprep.subr.bf16.mxu0 0
      %667 = vmatpush1.bf16.msra.mxu0 0
      %668 = vmatprep.subr.bf16.mxu0 0
      %669 = vmatpush1.bf16.msra.mxu0 0
      %670 = vmatprep.subr.bf16.mxu0 0
      %671 = vmatpush1.bf16.msra.mxu0 0
      %672 = vmatprep.subr.bf16.mxu0 0
      %673 = vmatpush1.bf16.msra.mxu0 0
      %674 = vmatprep.subr.bf16.mxu0 0
      %675 = vmatpush1.bf16.msra.mxu0 0
      %676 = vmatprep.mubr.bf16.mxu0 0
      %677 = vmatmul.mubr.bf16.gmra.mrb[0].mxu0 %v588
      %v678 = vpop.f32.mrb[0].mxu0
      %v679 = vadd.f32 0.0, %v678
      %v680 = vpop.f32.mrb[0].mxu0
      %v681 = vadd.f32 0.0, %v680
      %v682 = vpop.f32.mrb[0].mxu0
      %v683 = vpop.f32.mrb[0].mxu0
      %684 = vdwg.mxu0
      %v685 = vadd.f32 %v207, %v638
      %v686 = vadd.f32 %v208, %v640
      %687 = vst [vmem:[%s204] sm:$0xff] %v685
      %688 = vst [vmem:[%s204 + $0x8] sm:$0xff] %v686
      %v689 = vadd.f32 %v399, %v679
      %v690 = vadd.f32 %v400, %v681
      %s691 = scalar_lea.vmem %s204, 16
      %692 = vst [vmem:[%s691] sm:$0xff] %v689
      %693 = vst [vmem:[%s691 + $0x8] sm:$0xff] %v690
      %s694 = smul.u32 2, %s15
      %p695 = scmp.lt.s32.totalorder %s694, 3
      %s696 = scalar_select %p695, %s694, 3
      %s697 = smul.addr %s696, 2
      %s698 = smul.addr %s697, 8
      %s699 = scalar_lea.vmem %s4, %s698
      // Predicated region
      $region37: #{residual_forward.1} parent=35 // pred_check
        %p700 = pneg %p122
      $region38: #{residual_forward.1} parent=35 // pred_check_branch
        %702 = sbr.rel (%p700) target = $region40
      $region39: #{residual_forward.1} parent=35 // pred_region
        %s703 = smul.u32 2, %s15
      $region40: #{residual_forward.1} parent=35 // pred_fallthru
        _
    $region36: #{residual_forward.1} parent=5 // pred_fallthru
      _
    %p704 = scmp.le.s32.totalorder 2, %s10
    // Predicated region
    $region41: #{residual_forward.1} parent=5 // pred_check
      %p705 = pneg %p704
    $region42: #{residual_forward.1} parent=5 // pred_check_branch
      %707 = sbr.rel (%p705) target = $region44
    $region43: #{residual_forward.1} parent=5 // pred_region
      %s708 = ssub.s32 %s10, 2
      // Predicated region
      $region45: #{residual_forward.1} parent=43 // pred_check
        %p709 = pneg %p128
      $region46: #{residual_forward.1} parent=43 // pred_check_branch
        %711 = sbr.rel (%p709) target = $region48
      $region47: #{residual_forward.1} parent=43 // pred_region
        %s712 = smul.u32 2, %s16
        %p713 = scmp.lt.s32.totalorder %s712, 3
        %s714 = scalar_select %p713, %s712, 3
        %s715 = smul.addr %s714, 2
        %s716 = smul.addr %s715, 8
        %s717 = scalar_lea.vmem %s4, %s716
      $region48: #{residual_forward.1} parent=43 // pred_fallthru
        _
    $region44: #{residual_forward.1} parent=5 // pred_fallthru
      _
  $region6: #{residual_forward.1} parent=0 // loop_footer
    %s14 = sadd.s32 1, %s10
  $region7: #{residual_forward.1} parent=0 // loop_footer_branch
    %9 = sbr.rel target = $region3
  $region8: #{residual_forward.1} parent=0 // loop_exit
    _

</llo_original>
